<compile_context>
chip_gen: v6e
topology: v6e:2x2x1
jax: 0.10.0
libtpu: 0.0.40
codegen_flags: <defaults>
</compile_context>

<pallas_src>
import functools

import jax
import jax.numpy as jnp
from jax.experimental import pallas as pl
from jax.experimental.pallas import tpu as pltpu


_MIN_TILE_B = 16      # bf16 sublane tile
_MAX_TILE_B = 2048


# ----------------------------------------------------------------------------
# Kernel
# ----------------------------------------------------------------------------
def pp_mlp_kernel(x_ref, w_in_ref, vecs_ref, w_out_ref, b_out_ref, *rest,
                  group_size, eps, use_mlp_norm):
    o_ref = rest[-1]
    w_dtype = w_in_ref.dtype

    vecs = vecs_ref[...]                     # [3, H_p] fp32: b_in / gamma / beta
    b_in = vecs[0:1, :]
    gamma = vecs[1:2, :]
    beta = vecs[2:3, :]

    # dense_in: MXU matmul (weight-dtype inputs, fp32 accumulation).
    h = jnp.dot(x_ref[...].astype(w_dtype), w_in_ref[...],
                preferred_element_type=jnp.float32) + b_in        # [TB, H_p] fp32

    if use_mlp_norm:
        gsel = rest[0][...]                  # [H_p, G] one-hot (fp32, resident)
        gsel_t = rest[1][...]                # [G, H_p]
        inv_gs = 1.0 / group_size

        # Per-group sum(h) and sum(h*h) via two small MXU dots (fp32 path).
        sum_h = jnp.dot(h, gsel, preferred_element_type=jnp.float32)     # [TB, G]
        sum_h2 = jnp.dot(h * h, gsel, preferred_element_type=jnp.float32)
        grp_mean = sum_h * inv_gs
        grp_var = jnp.maximum(sum_h2 * inv_gs - grp_mean * grp_mean, 0.0)

        # Broadcast group stats back to channels.
        mean_c = jnp.dot(grp_mean, gsel_t, preferred_element_type=jnp.float32)
        var_c = jnp.dot(grp_var, gsel_t, preferred_element_type=jnp.float32)

        h = (h - mean_c) * jax.lax.rsqrt(var_c + eps) * gamma + beta

    # ReLU (fp32 VPU)
    h = jnp.maximum(h, 0.0)

    # dense1_out
    out = jnp.dot(h.astype(w_dtype), w_out_ref[...],
                  preferred_element_type=jnp.float32) + b_out_ref[...]
    o_ref[...] = out.astype(o_ref.dtype)


# ----------------------------------------------------------------------------
# Wrapper helpers
# ----------------------------------------------------------------------------
def _round_up(x, m):
    return (x + m - 1) // m * m


def _vmem_capacity_bytes():
    try:
        info = pltpu.get_tpu_info()
        cap = getattr(info, "vmem_capacity_bytes", None)
        if cap:
            return int(cap)
    except Exception:
        pass
    return 128 * 1024 * 1024


def _vmem_estimate_bytes(tb, in_f, h_p, p_f, groups, x_bytes, w_bytes, out_bytes):
    r8 = lambda n: _round_up(max(int(n), 1), 8)
    r128 = lambda n: _round_up(max(int(n), 1), 128)
    act = 2 * tb * r128(in_f) * x_bytes + 2 * tb * r128(p_f) * out_bytes
    # resident weights; conservatively count the default double-buffer
    wts = 2 * (r8(in_f) * r128(h_p) + r8(h_p) * r128(p_f)) * w_bytes
    vec = (r8(3) * r128(h_p) + r8(1) * r128(p_f)) * 4
    sel = (r8(h_p) * r128(groups) + r8(groups) * r128(h_p)) * 4 if groups else 0
    tmp = 6 * tb * r128(h_p) * 4          # fp32 in-kernel intermediates
    return act + wts + vec + sel + tmp


def _choose_tile_b(batch, est_fn, budget):
    b_cap = _round_up(batch, _MIN_TILE_B)
    tb = _MAX_TILE_B
    while tb > _MIN_TILE_B and (tb > b_cap or est_fn(tb) > budget):
        tb //= 2
    # v7x megacore: give the second TensorCore work when the batch allows.
    if tb > _MIN_TILE_B and _round_up(batch, tb) // tb < 2:
        tb //= 2
    return max(tb, _MIN_TILE_B)


# ----------------------------------------------------------------------------
# Wrapper
# ----------------------------------------------------------------------------
def pp_model_mlp(x, params, *, group_norm_groups, use_mlp_norm, eps=1e-5,
                 weight_dtype=jnp.bfloat16):
    """x: [..., input_size].  Leading dims (e.g. meta_batch, support) are
    flattened into one batch axis so many ANIL tasks share one pallas_call."""
    orig_dtype = x.dtype
    lead = x.shape[:-1]
    In = x.shape[-1]
    x2 = x.reshape(-1, In)
    B = x2.shape[0]

    H = params["w_in"].shape[0]       # torch Linear weight is (out, in)
    P = params["w_out"].shape[0]
    G = group_norm_groups
    assert H % G == 0, "hidden_size must be divisible by group_norm_groups"
    group_size = H // G

    # Only the kernel-internal hidden dim is padded (weights stay resident,
    # so this never touches HBM per tile).  Streamed x / out keep true dims.
    H_p = _round_up(H, 128)

    w_bytes = jnp.dtype(weight_dtype).itemsize
    x_bytes = w_bytes                       # x streamed at the weight dtype
    out_bytes = jnp.dtype(orig_dtype).itemsize

    cap = _vmem_capacity_bytes()
    budget = max(cap * 3 // 8, 16 * 1024 * 1024)      # ~24 MiB v7x, ~48 MiB v5e/v6e
    est_fn = lambda t: _vmem_estimate_bytes(
        t, In, H_p, P, G if use_mlp_norm else 0, x_bytes, w_bytes, out_bytes)
    tb = _choose_tile_b(B, est_fn, budget)
    B_p = _round_up(B, tb)

    # Stream x in the weight dtype; pad only the batch remainder (no feature
    # padding, no extra HBM pad copy when B is already aligned).
    x_p = x2.astype(weight_dtype)
    if B_p != B:
        x_p = jnp.pad(x_p, ((0, B_p - B), (0, 0)))

    w_in_t = jnp.pad(params["w_in"].astype(jnp.float32).T,
                     ((0, 0), (0, H_p - H))).astype(weight_dtype)      # [In, H_p]
    w_out_t = jnp.pad(params["w_out"].astype(jnp.float32).T,
                      ((0, H_p - H), (0, 0))).astype(weight_dtype)     # [H_p, P]
    b_out = params["b_out"].astype(jnp.float32).reshape(1, P)

    gamma = params.get("gamma", jnp.ones((H,), jnp.float32))
    beta = params.get("beta", jnp.zeros((H,), jnp.float32))
    vecs = jnp.stack([                                                  # [3, H_p]
        jnp.pad(params["b_in"].astype(jnp.float32), (0, H_p - H)),
        jnp.pad(gamma.astype(jnp.float32), (0, H_p - H)),
        jnp.pad(beta.astype(jnp.float32), (0, H_p - H)),
    ], axis=0)

    kernel = functools.partial(
        pp_mlp_kernel, group_size=group_size, eps=float(eps),
        use_mlp_norm=use_mlp_norm)

    grid = (B_p // tb,)
    batch_map = lambda i: (i, 0)
    const_map = lambda i: (0, 0)

    in_specs = [
        pl.BlockSpec((tb, In), batch_map),      # x: batch-tiled, pipelined
        pl.BlockSpec((In, H_p), const_map),     # W_in  (resident)
        pl.BlockSpec((3, H_p), const_map),      # b_in / gamma / beta packed
        pl.BlockSpec((H_p, P), const_map),      # W_out (resident)
        pl.BlockSpec((1, P), const_map),        # b_out
    ]
    operands = [x_p, w_in_t, vecs, w_out_t, b_out]

    sel_bytes = 0
    if use_mlp_norm:
        ch = jnp.arange(H_p)
        grp = jnp.arange(G)
        # Padded channels (ch >= H) never select any group -> exact stats.
        gsel = ((ch[:, None] // group_size == grp[None, :])
                & (ch[:, None] < H)).astype(jnp.float32)                # [H_p, G]
        gsel_t = gsel.T                                                  # [G, H_p]
        in_specs += [pl.BlockSpec((H_p, G), const_map),
                     pl.BlockSpec((G, H_p), const_map)]
        operands += [gsel, gsel_t]
        sel_bytes = (gsel.size + gsel_t.size) * 4

    flops = 2 * B_p * (In * H_p + H_p * P)
    transcendentals = 0
    if use_mlp_norm:
        flops += 8 * B_p * H_p * G        # four group-stat / broadcast dots
        transcendentals = B_p * H_p       # rsqrt per hidden element
    bytes_accessed = (x_p.size * x_bytes
                      + (w_in_t.size + w_out_t.size) * w_bytes
                      + (vecs.size + b_out.size) * 4 + sel_bytes
                      + B_p * P * out_bytes)

    est = est_fn(tb)
    vmem_limit = int(min(max(2 * est, 32 * 1024 * 1024), cap // 2))

    out = pl.pallas_call(
        kernel,
        out_shape=jax.ShapeDtypeStruct((B_p, P), orig_dtype),
        grid=grid,
        in_specs=in_specs,
        out_specs=pl.BlockSpec((tb, P), batch_map),
        compiler_params=pltpu.CompilerParams(
            dimension_semantics=("parallel",),
            vmem_limit_bytes=vmem_limit),
        cost_estimate=pl.CostEstimate(
            flops=int(flops), transcendentals=int(transcendentals),
            bytes_accessed=int(bytes_accessed)),
    )(*operands)

    return out[:B, :].reshape(*lead, P)


# ----------------------------------------------------------------------------
# Plain-JAX reference (mirrors PyTorch semantics)
# ----------------------------------------------------------------------------
def pp_model_mlp_ref(x, params, *, group_norm_groups, use_mlp_norm, eps=1e-5):
    h = x @ params["w_in"].T + params["b_in"]
    if use_mlp_norm:
        G = group_norm_groups
        lead = h.shape[:-1]
        H = h.shape[-1]
        hg = h.reshape(*lead, G, H // G)
        mean = hg.mean(axis=-1, keepdims=True)
        var = hg.var(axis=-1, keepdims=True)       # biased, like torch GroupNorm
        hg = (hg - mean) / jnp.sqrt(var + eps)
        h = hg.reshape(*lead, H) * params["gamma"] + params["beta"]
    h = jnp.maximum(h, 0.0)
    return h @ params["w_out"].T + params["b_out"]


if __name__ == "__main__":
    # Small, module-consistent shapes: [meta_batch, num_support, input_size].
    meta_batch = 2
    num_support = 4
    input_size = 32
    hidden_size = 32
    projection_size = 16
    group_norm_groups = 4
    use_mlp_norm = True

    key = jax.random.PRNGKey(0)
    kx, k1, k2, k3, k4 = jax.random.split(key, 5)

    x = jax.random.normal(kx, (meta_batch, num_support, input_size), jnp.float32)

    # Deterministic synthetic parameters (torch Linear weight shape = (out, in)).
    params = {
        "w_in": jax.random.normal(k1, (hidden_size, input_size), jnp.float32) * 0.1,
        "b_in": jax.random.normal(k2, (hidden_size,), jnp.float32) * 0.1,
        "gamma": jnp.ones((hidden_size,), jnp.float32) * 1.5,
        "beta": jnp.full((hidden_size,), 0.25, jnp.float32),
        "w_out": jax.random.normal(k3, (projection_size, hidden_size), jnp.float32) * 0.1,
        "b_out": jax.random.normal(k4, (projection_size,), jnp.float32) * 0.1,
    }

    ref = pp_model_mlp_ref(
        x, params,
        group_norm_groups=group_norm_groups,
        use_mlp_norm=use_mlp_norm,
    )

    # fp32-weight path: tight check of the GroupNorm / matmul math.
    out_f32 = pp_model_mlp(
        x, params,
        group_norm_groups=group_norm_groups,
        use_mlp_norm=use_mlp_norm,
        weight_dtype=jnp.float32,
    )
    out_f32 = jax.block_until_ready(out_f32)
    assert out_f32.shape == (meta_batch, num_support, projection_size)
    assert jnp.allclose(out_f32, ref, atol=1e-4, rtol=1e-4), "fp32 mismatch vs reference"

    # Default bf16 path (bf16 weights AND bf16-streamed x): looser tolerance.
    out_bf16 = pp_model_mlp(
        x, params,
        group_norm_groups=group_norm_groups,
        use_mlp_norm=use_mlp_norm,
    )
    out_bf16 = jax.block_until_ready(out_bf16)
    assert out_bf16.shape == (meta_batch, num_support, projection_size)
    assert jnp.allclose(out_bf16, ref, atol=5e-2, rtol=5e-2), "bf16 mismatch vs reference"

    # use_mlp_norm=False path (plain MLP, no GroupNorm).
    ref_nonorm = pp_model_mlp_ref(
        x, params, group_norm_groups=group_norm_groups, use_mlp_norm=False)
    out_nonorm = pp_model_mlp(
        x, params, group_norm_groups=group_norm_groups, use_mlp_norm=False,
        weight_dtype=jnp.float32)
    out_nonorm = jax.block_until_ready(out_nonorm)
    assert jnp.allclose(out_nonorm, ref_nonorm, atol=1e-4, rtol=1e-4), \
        "no-norm mismatch vs reference"

    print("KERNEL_OK")
</pallas_src>

<mosaic_0001>
module attributes {stable_mosaic.version = 11 : i64} {
  func.func @pp_mlp_kernel(%arg0: i32, %arg1: memref<16x32xf32, #tpu.memory_space<vmem>>, %arg2: memref<32x128xf32, #tpu.memory_space<vmem>>, %arg3: memref<3x128xf32, #tpu.memory_space<vmem>>, %arg4: memref<128x16xf32, #tpu.memory_space<vmem>>, %arg5: memref<1x16xf32, #tpu.memory_space<vmem>>, %arg6: memref<128x4xf32, #tpu.memory_space<vmem>>, %arg7: memref<4x128xf32, #tpu.memory_space<vmem>>, %arg8: memref<16x16xf32, #tpu.memory_space<vmem>>) attributes {dimension_semantics = [#tpu.dimension_semantics<parallel>], iteration_bounds = array<i64: 1>, scalar_prefetch = 0 : i64, scratch_operands = 0 : i64, tpu.core_type = #tpu.core_type<tc>, window_params = [{transform_indices = @transform_0, window_bounds = array<i64: 16, 32>}, {pipeline_mode = #tpu.pipeline_mode<synchronous>, transform_indices = @transform_1, window_bounds = array<i64: 32, 128>}, {pipeline_mode = #tpu.pipeline_mode<synchronous>, transform_indices = @transform_2, window_bounds = array<i64: 3, 128>}, {pipeline_mode = #tpu.pipeline_mode<synchronous>, transform_indices = @transform_3, window_bounds = array<i64: 128, 16>}, {pipeline_mode = #tpu.pipeline_mode<synchronous>, transform_indices = @transform_4, window_bounds = array<i64: 1, 16>}, {pipeline_mode = #tpu.pipeline_mode<synchronous>, transform_indices = @transform_5, window_bounds = array<i64: 128, 4>}, {pipeline_mode = #tpu.pipeline_mode<synchronous>, transform_indices = @transform_6, window_bounds = array<i64: 4, 128>}, {transform_indices = @transform_7, window_bounds = array<i64: 16, 16>}]} {
    %c0 = arith.constant 0 : index
    %c0_0 = arith.constant 0 : index
    %0 = vector.load %arg3[%c0, %c0_0] : memref<3x128xf32, #tpu.memory_space<vmem>>, vector<3x128xf32>
    %1 = vector.extract_strided_slice %0 {offsets = [0, 0], sizes = [1, 128], strides = [1, 1]} : vector<3x128xf32> to vector<1x128xf32>
    %2 = vector.extract_strided_slice %0 {offsets = [1, 0], sizes = [1, 128], strides = [1, 1]} : vector<3x128xf32> to vector<1x128xf32>
    %3 = vector.extract_strided_slice %0 {offsets = [2, 0], sizes = [1, 128], strides = [1, 1]} : vector<3x128xf32> to vector<1x128xf32>
    %c0_1 = arith.constant 0 : index
    %c0_2 = arith.constant 0 : index
    %4 = vector.load %arg1[%c0_1, %c0_2] : memref<16x32xf32, #tpu.memory_space<vmem>>, vector<16x32xf32>
    %c0_3 = arith.constant 0 : index
    %c0_4 = arith.constant 0 : index
    %5 = vector.load %arg2[%c0_3, %c0_4] : memref<32x128xf32, #tpu.memory_space<vmem>>, vector<32x128xf32>
    %cst = arith.constant dense<0.000000e+00> : vector<16x128xf32>
    %6 = tpu.matmul %4, %5, %cst {dimension_numbers = #tpu.dot_dimension_numbers<[1], [0], [0], [1], [0, 0, 1, 1], [], []>} : vector<16x32xf32>, vector<32x128xf32>, vector<16x128xf32> -> vector<16x128xf32>
    %7 = vector.broadcast %1 : vector<1x128xf32> to vector<16x128xf32>
    %8 = arith.addf %6, %7 : vector<16x128xf32>
    %c0_5 = arith.constant 0 : index
    %c0_6 = arith.constant 0 : index
    %9 = vector.load %arg6[%c0_5, %c0_6] : memref<128x4xf32, #tpu.memory_space<vmem>>, vector<128x4xf32>
    %c0_7 = arith.constant 0 : index
    %c0_8 = arith.constant 0 : index
    %10 = vector.load %arg7[%c0_7, %c0_8] : memref<4x128xf32, #tpu.memory_space<vmem>>, vector<4x128xf32>
    %cst_9 = arith.constant dense<0.000000e+00> : vector<16x4xf32>
    %11 = tpu.matmul %8, %9, %cst_9 {dimension_numbers = #tpu.dot_dimension_numbers<[1], [0], [0], [1], [0, 0, 1, 1], [], []>} : vector<16x128xf32>, vector<128x4xf32>, vector<16x4xf32> -> vector<16x4xf32>
    %12 = arith.mulf %8, %8 : vector<16x128xf32>
    %cst_10 = arith.constant dense<0.000000e+00> : vector<16x4xf32>
    %13 = tpu.matmul %12, %9, %cst_10 {dimension_numbers = #tpu.dot_dimension_numbers<[1], [0], [0], [1], [0, 0, 1, 1], [], []>} : vector<16x128xf32>, vector<128x4xf32>, vector<16x4xf32> -> vector<16x4xf32>
    %cst_11 = arith.constant 1.250000e-01 : f32
    %14 = vector.broadcast %cst_11 : f32 to vector<16x4xf32>
    %15 = arith.mulf %11, %14 : vector<16x4xf32>
    %cst_12 = arith.constant 1.250000e-01 : f32
    %16 = vector.broadcast %cst_12 : f32 to vector<16x4xf32>
    %17 = arith.mulf %13, %16 : vector<16x4xf32>
    %18 = arith.mulf %15, %15 : vector<16x4xf32>
    %19 = arith.subf %17, %18 : vector<16x4xf32>
    %cst_13 = arith.constant 0.000000e+00 : f32
    %20 = vector.broadcast %cst_13 : f32 to vector<16x4xf32>
    %21 = arith.maximumf %19, %20 : vector<16x4xf32>
    %cst_14 = arith.constant dense<0.000000e+00> : vector<16x128xf32>
    %22 = tpu.matmul %15, %10, %cst_14 {dimension_numbers = #tpu.dot_dimension_numbers<[1], [0], [0], [1], [0, 0, 1, 1], [], []>} : vector<16x4xf32>, vector<4x128xf32>, vector<16x128xf32> -> vector<16x128xf32>
    %cst_15 = arith.constant dense<0.000000e+00> : vector<16x128xf32>
    %23 = tpu.matmul %21, %10, %cst_15 {dimension_numbers = #tpu.dot_dimension_numbers<[1], [0], [0], [1], [0, 0, 1, 1], [], []>} : vector<16x4xf32>, vector<4x128xf32>, vector<16x128xf32> -> vector<16x128xf32>
    %24 = arith.subf %8, %22 : vector<16x128xf32>
    %cst_16 = arith.constant 9.99999974E-6 : f32
    %25 = vector.broadcast %cst_16 : f32 to vector<16x128xf32>
    %26 = arith.addf %23, %25 : vector<16x128xf32>
    %27 = math.rsqrt %26 : vector<16x128xf32>
    %28 = arith.mulf %24, %27 : vector<16x128xf32>
    %29 = vector.broadcast %2 : vector<1x128xf32> to vector<16x128xf32>
    %30 = arith.mulf %28, %29 : vector<16x128xf32>
    %31 = vector.broadcast %3 : vector<1x128xf32> to vector<16x128xf32>
    %32 = arith.addf %30, %31 : vector<16x128xf32>
    %cst_17 = arith.constant 0.000000e+00 : f32
    %33 = vector.broadcast %cst_17 : f32 to vector<16x128xf32>
    %34 = arith.maximumf %32, %33 : vector<16x128xf32>
    %c0_18 = arith.constant 0 : index
    %c0_19 = arith.constant 0 : index
    %35 = vector.load %arg4[%c0_18, %c0_19] : memref<128x16xf32, #tpu.memory_space<vmem>>, vector<128x16xf32>
    %cst_20 = arith.constant dense<0.000000e+00> : vector<16x16xf32>
    %36 = tpu.matmul %34, %35, %cst_20 {dimension_numbers = #tpu.dot_dimension_numbers<[1], [0], [0], [1], [0, 0, 1, 1], [], []>} : vector<16x128xf32>, vector<128x16xf32>, vector<16x16xf32> -> vector<16x16xf32>
    %c0_21 = arith.constant 0 : index
    %c0_22 = arith.constant 0 : index
    %37 = vector.load %arg5[%c0_21, %c0_22] : memref<1x16xf32, #tpu.memory_space<vmem>>, vector<1x16xf32>
    %38 = vector.broadcast %37 : vector<1x16xf32> to vector<16x16xf32>
    %39 = arith.addf %36, %38 : vector<16x16xf32>
    %c0_23 = arith.constant 0 : index
    %c0_24 = arith.constant 0 : index
    %40 = vector.load %arg8[%c0_23, %c0_24] : memref<16x16xf32, #tpu.memory_space<vmem>>, vector<16x16xf32>
    tpu.vector_store %arg8[%c0_23, %c0_24], %39 {strides = array<i32>} : memref<16x16xf32, #tpu.memory_space<vmem>>, vector<16x16xf32>,
    return
  }
  func.func @transform_0(%arg0: i32) -> (i32, i32) {
    %c0_i32 = arith.constant 0 : i32
    %c0_i32_0 = arith.constant 0 : i32
    return %arg0, %c0_i32 : i32, i32
  }
  func.func @transform_1(%arg0: i32) -> (i32, i32) {
    %c0_i32 = arith.constant 0 : i32
    %c0_i32_0 = arith.constant 0 : i32
    %c0_i32_1 = arith.constant 0 : i32
    return %c0_i32, %c0_i32_0 : i32, i32
  }
  func.func @transform_2(%arg0: i32) -> (i32, i32) {
    %c0_i32 = arith.constant 0 : i32
    %c0_i32_0 = arith.constant 0 : i32
    %c0_i32_1 = arith.constant 0 : i32
    return %c0_i32, %c0_i32_0 : i32, i32
  }
  func.func @transform_3(%arg0: i32) -> (i32, i32) {
    %c0_i32 = arith.constant 0 : i32
    %c0_i32_0 = arith.constant 0 : i32
    %c0_i32_1 = arith.constant 0 : i32
    return %c0_i32, %c0_i32_0 : i32, i32
  }
  func.func @transform_4(%arg0: i32) -> (i32, i32) {
    %c0_i32 = arith.constant 0 : i32
    %c0_i32_0 = arith.constant 0 : i32
    %c0_i32_1 = arith.constant 0 : i32
    return %c0_i32, %c0_i32_0 : i32, i32
  }
  func.func @transform_5(%arg0: i32) -> (i32, i32) {
    %c0_i32 = arith.constant 0 : i32
    %c0_i32_0 = arith.constant 0 : i32
    %c0_i32_1 = arith.constant 0 : i32
    return %c0_i32, %c0_i32_0 : i32, i32
  }
  func.func @transform_6(%arg0: i32) -> (i32, i32) {
    %c0_i32 = arith.constant 0 : i32
    %c0_i32_0 = arith.constant 0 : i32
    %c0_i32_1 = arith.constant 0 : i32
    return %c0_i32, %c0_i32_0 : i32, i32
  }
  func.func @transform_7(%arg0: i32) -> (i32, i32) {
    %c0_i32 = arith.constant 0 : i32
    %c0_i32_0 = arith.constant 0 : i32
    return %arg0, %c0_i32 : i32, i32
  }
}

</mosaic_0001>

<llo_original>
// kernel: tpu_custom_call.1
$region0: #{tpu_custom_call.1}
  #allocation0 [shape = 'u32[]', space=smem, size = 0x4, offset = 0x4, fixed_abs, tag = 'smem constant byte address 0x4 - core index']
  #allocation1 [shape = 'u32[144,128]{1,0:T(1,128)}', space=vmem, size = 0x12000, scoped, tag = 'internal scratch']
  %s0 = inlined_call_operand.vmem [shape: f32[16,32], index: 0, kind: input, shape index: {}]
  %s1 = inlined_call_operand.vmem [shape: f32[32,128], index: 1, kind: input, shape index: {}]
  %s2 = inlined_call_operand.vmem [shape: f32[3,128], index: 2, kind: input, shape index: {}]
  %s3 = inlined_call_operand.vmem [shape: f32[128,16], index: 3, kind: input, shape index: {}]
  %s4 = inlined_call_operand.vmem [shape: f32[1,16], index: 4, kind: input, shape index: {}]
  %s5 = inlined_call_operand.vmem [shape: f32[128,4], index: 5, kind: input, shape index: {}]
  %s6 = inlined_call_operand.vmem [shape: f32[4,128], index: 6, kind: input, shape index: {}]
  %s7 = inlined_call_operand.hbm [shape: f32[16,16], index: 7, kind: output, shape index: {}]
  %s8 = sld [smem:[#allocation0]]
  $region38: #{tpu_custom_call.1} parent=0
    _
  %s10 = ssub.s32 1, %s8
  %s11 = scalar_select 0, %s10, %s8
  $region1: #{tpu_custom_call.1} parent=0
    #allocation2 [shape = 'u8[8192]{0}', space=vmem, size = 0x2000, scoped, tag = 'output window, operand 0, single buffered']
    #allocation3 [shape = 's32[1]{0}', space=sflag, size = 0x4, scoped, tag = 'scoped memory for tpu_custom_call.1']
    %12 = vsyncpa [#allocation3], 0
    // Predicated region
    $region2: #{tpu_custom_call.1} parent=1 // pred_check
      _
    $region3: #{tpu_custom_call.1} parent=1 // pred_check_branch
      %14 = sbr.rel (0) target = $region5
    $region4: #{tpu_custom_call.1} parent=1 // pred_region
      _
    $region5: #{tpu_custom_call.1} parent=1 // pred_fallthru
      _
    // Predicated region
    $region6: #{tpu_custom_call.1} parent=1 // pred_check
      _
    $region7: #{tpu_custom_call.1} parent=1 // pred_check_branch
      %16 = sbr.rel (0) target = $region9
    $region8: #{tpu_custom_call.1} parent=1 // pred_region
      _
    $region9: #{tpu_custom_call.1} parent=1 // pred_fallthru
      _
    // Predicated region
    $region10: #{tpu_custom_call.1} parent=1 // pred_check
      _
    $region11: #{tpu_custom_call.1} parent=1 // pred_check_branch
      %18 = sbr.rel (0) target = $region13
    $region12: #{tpu_custom_call.1} parent=1 // pred_region
      _
    $region13: #{tpu_custom_call.1} parent=1 // pred_fallthru
      _
    // Predicated region
    $region14: #{tpu_custom_call.1} parent=1 // pred_check
      _
    $region15: #{tpu_custom_call.1} parent=1 // pred_check_branch
      %20 = sbr.rel (0) target = $region17
    $region16: #{tpu_custom_call.1} parent=1 // pred_region
      _
    $region17: #{tpu_custom_call.1} parent=1 // pred_fallthru
      _
    // Predicated region
    $region18: #{tpu_custom_call.1} parent=1 // pred_check
      _
    $region19: #{tpu_custom_call.1} parent=1 // pred_check_branch
      %22 = sbr.rel (0) target = $region21
    $region20: #{tpu_custom_call.1} parent=1 // pred_region
      _
    $region21: #{tpu_custom_call.1} parent=1 // pred_fallthru
      _
    // Predicated region
    $region22: #{tpu_custom_call.1} parent=1 // pred_check
      _
    $region23: #{tpu_custom_call.1} parent=1 // pred_check_branch
      %24 = sbr.rel (0) target = $region25
    $region24: #{tpu_custom_call.1} parent=1 // pred_region
      _
    $region25: #{tpu_custom_call.1} parent=1 // pred_fallthru
      _
    // Predicated region
    $region26: #{tpu_custom_call.1} parent=1 // pred_check
      _
    $region27: #{tpu_custom_call.1} parent=1 // pred_check_branch
      %26 = sbr.rel (0) target = $region29
    $region28: #{tpu_custom_call.1} parent=1 // pred_region
      _
    $region29: #{tpu_custom_call.1} parent=1 // pred_fallthru
      _
    %v27 = vld [vmem:[%s2] sm:$0x7]
    %v28 = vld [vmem:[%s0] sm:$0xff]
    %v29 = vld [vmem:[%s0 + $0x8] sm:$0xff]
    %v30 = vld [vmem:[%s1] sm:$0xff]
    %v31 = vld [vmem:[%s1 + $0x8] sm:$0xff]
    %v32 = vld [vmem:[%s1 + $0x10] sm:$0xff]
    %v33 = vld [vmem:[%s1 + $0x18] sm:$0xff]
    %v34 = vlaneseq
    %v35 = vshrl.u32 %v34, 7
    %v36 = vsub.s32 0, %v35
    %v37 = vrot.slane %v27, %v36
    %vm38 = vcmask 261120
    %v40 = vsel %vm38, %v28, 0
    %v43 = vsel %vm38, %v29, 0
    %45 = vmatprep.subr.mxu0 0.0
    %46 = vmatpush1.msra.mxu0 0.0
    %47 = vmatprep.subr.mxu0 0.0
    %48 = vmatpush1.msra.mxu0 0.0
    %49 = vmatprep.subr.mxu0 0.0
    %50 = vmatpush1.msra.mxu0 0.0
    %51 = vmatprep.subr.mxu0 0.0
    %52 = vmatpush1.msra.mxu0 0.0
    %53 = vmatprep.subr.mxu0 0.0
    %54 = vmatpush1.msra.mxu0 0.0
    %55 = vmatprep.subr.mxu0 0.0
    %56 = vmatpush1.msra.mxu0 0.0
    %57 = vmatprep.subr.mxu0 0.0
    %58 = vmatpush1.msra.mxu0 0.0
    %59 = vmatprep.subr.mxu0 0.0
    %60 = vmatpush1.msra.mxu0 0.0
    %61 = vmatprep.subr.mxu0 0.0
    %62 = vmatpush1.msra.mxu0 0.0
    %63 = vmatprep.subr.mxu0 0.0
    %64 = vmatpush1.msra.mxu0 0.0
    %65 = vmatprep.subr.mxu0 0.0
    %66 = vmatpush1.msra.mxu0 0.0
    %67 = vmatprep.subr.mxu0 0.0
    %68 = vmatpush1.msra.mxu0 0.0
    %69 = vmatprep.subr.mxu0 0.0
    %70 = vmatpush1.msra.mxu0 %v33
    %71 = vmatprep.subr.mxu0 0.0
    %72 = vmatpush1.msra.mxu0 %v32
    %73 = vmatprep.subr.mxu0 0.0
    %74 = vmatpush1.msra.mxu0 %v31
    %75 = vmatprep.subr.mxu0 0.0
    %76 = vmatpush1.msra.mxu0 %v30
    %77 = vmatprep.subr.mxu0 0.0
    %78 = vmatpush2.msra.mxu0 0.0
    %79 = vmatprep.subr.mxu0 0.0
    %80 = vmatpush2.msra.mxu0 0.0
    %81 = vmatprep.subr.mxu0 0.0
    %82 = vmatpush2.msra.mxu0 0.0
    %83 = vmatprep.subr.mxu0 0.0
    %84 = vmatpush2.msra.mxu0 0.0
    %85 = vmatprep.subr.mxu0 0.0
    %86 = vmatpush2.msra.mxu0 0.0
    %87 = vmatprep.subr.mxu0 0.0
    %88 = vmatpush2.msra.mxu0 0.0
    %89 = vmatprep.subr.mxu0 0.0
    %90 = vmatpush2.msra.mxu0 0.0
    %91 = vmatprep.subr.mxu0 0.0
    %92 = vmatpush2.msra.mxu0 0.0
    %93 = vmatprep.subr.mxu0 0.0
    %94 = vmatpush2.msra.mxu0 0.0
    %95 = vmatprep.subr.mxu0 0.0
    %96 = vmatpush2.msra.mxu0 0.0
    %97 = vmatprep.subr.mxu0 0.0
    %98 = vmatpush2.msra.mxu0 0.0
    %99 = vmatprep.subr.mxu0 0.0
    %100 = vmatpush2.msra.mxu0 0.0
    %101 = vmatprep.subr.mxu0 0.0
    %102 = vmatpush2.msra.mxu0 0.0
    %103 = vmatprep.subr.mxu0 0.0
    %104 = vmatpush2.msra.mxu0 0.0
    %105 = vmatprep.subr.mxu0 0.0
    %106 = vmatpush2.msra.mxu0 0.0
    %107 = vmatprep.subr.mxu0 0.0
    %108 = vmatpush2.msra.mxu0 0.0
    %109 = vmatprep.mubr.f32.mxu0 0.0
    %110 = vmatmul.mubr.f32.gmra.mxu0 %v40
    %v111 = vpop.f32.mrf.mxu0
    %v112 = vadd.f32 %v37, %v111
    %v113 = vpop.f32.mrf.mxu0
    %114 = vmatprep.mubr.f32.mxu0 0.0
    %115 = vmatmul.mubr.f32.gmra.mxu0 %v43
    %v116 = vpop.f32.mrf.mxu0
    %v117 = vadd.f32 %v37, %v116
    %v118 = vpop.f32.mrf.mxu0
    %119 = vdwg.mxu0
    %v120 = vld [vmem:[%s5] sm:$0xff]
    %v121 = vld [vmem:[%s5 + $0x8] sm:$0xff]
    %v122 = vld [vmem:[%s5 + $0x10] sm:$0xff]
    %v123 = vld [vmem:[%s5 + $0x18] sm:$0xff]
    %v124 = vld [vmem:[%s5 + $0x20] sm:$0xff]
    %v125 = vld [vmem:[%s5 + $0x28] sm:$0xff]
    %v126 = vld [vmem:[%s5 + $0x30] sm:$0xff]
    %v127 = vld [vmem:[%s5 + $0x38] sm:$0xff]
    %v128 = vld [vmem:[%s5 + $0x40] sm:$0xff]
    %v129 = vld [vmem:[%s5 + $0x48] sm:$0xff]
    %v130 = vld [vmem:[%s5 + $0x50] sm:$0xff]
    %v131 = vld [vmem:[%s5 + $0x58] sm:$0xff]
    %v132 = vld [vmem:[%s5 + $0x60] sm:$0xff]
    %v133 = vld [vmem:[%s5 + $0x68] sm:$0xff]
    %v134 = vld [vmem:[%s5 + $0x70] sm:$0xff]
    %v135 = vld [vmem:[%s5 + $0x78] sm:$0xff]
    %v136 = vld [vmem:[%s6] sm:$0xf]
    %137 = vmatprep.subr.mxu0 0.0
    %138 = vmatpush1.msra.mxu0 %v135
    %139 = vmatprep.subr.mxu0 0.0
    %140 = vmatpush1.msra.mxu0 %v134
    %141 = vmatprep.subr.mxu0 0.0
    %142 = vmatpush1.msra.mxu0 %v133
    %143 = vmatprep.subr.mxu0 0.0
    %144 = vmatpush1.msra.mxu0 %v132
    %145 = vmatprep.subr.mxu0 0.0
    %146 = vmatpush1.msra.mxu0 %v131
    %147 = vmatprep.subr.mxu0 0.0
    %148 = vmatpush1.msra.mxu0 %v130
    %149 = vmatprep.subr.mxu0 0.0
    %150 = vmatpush1.msra.mxu0 %v129
    %151 = vmatprep.subr.mxu0 0.0
    %152 = vmatpush1.msra.mxu0 %v128
    %153 = vmatprep.subr.mxu0 0.0
    %154 = vmatpush1.msra.mxu0 %v127
    %155 = vmatprep.subr.mxu0 0.0
    %156 = vmatpush1.msra.mxu0 %v126
    %157 = vmatprep.subr.mxu0 0.0
    %158 = vmatpush1.msra.mxu0 %v125
    %159 = vmatprep.subr.mxu0 0.0
    %160 = vmatpush1.msra.mxu0 %v124
    %161 = vmatprep.subr.mxu0 0.0
    %162 = vmatpush1.msra.mxu0 %v123
    %163 = vmatprep.subr.mxu0 0.0
    %164 = vmatpush1.msra.mxu0 %v122
    %165 = vmatprep.subr.mxu0 0.0
    %166 = vmatpush1.msra.mxu0 %v121
    %167 = vmatprep.subr.mxu0 0.0
    %168 = vmatpush1.msra.mxu0 %v120
    %169 = vmatprep.subr.mxu0 0.0
    %170 = vmatpush2.msra.mxu0 0.0
    %171 = vmatprep.subr.mxu0 0.0
    %172 = vmatpush2.msra.mxu0 0.0
    %173 = vmatprep.subr.mxu0 0.0
    %174 = vmatpush2.msra.mxu0 0.0
    %175 = vmatprep.subr.mxu0 0.0
    %176 = vmatpush2.msra.mxu0 0.0
    %177 = vmatprep.subr.mxu0 0.0
    %178 = vmatpush2.msra.mxu0 0.0
    %179 = vmatprep.subr.mxu0 0.0
    %180 = vmatpush2.msra.mxu0 0.0
    %181 = vmatprep.subr.mxu0 0.0
    %182 = vmatpush2.msra.mxu0 0.0
    %183 = vmatprep.subr.mxu0 0.0
    %184 = vmatpush2.msra.mxu0 0.0
    %185 = vmatprep.subr.mxu0 0.0
    %186 = vmatpush2.msra.mxu0 0.0
    %187 = vmatprep.subr.mxu0 0.0
    %188 = vmatpush2.msra.mxu0 0.0
    %189 = vmatprep.subr.mxu0 0.0
    %190 = vmatpush2.msra.mxu0 0.0
    %191 = vmatprep.subr.mxu0 0.0
    %192 = vmatpush2.msra.mxu0 0.0
    %193 = vmatprep.subr.mxu0 0.0
    %194 = vmatpush2.msra.mxu0 0.0
    %195 = vmatprep.subr.mxu0 0.0
    %196 = vmatpush2.msra.mxu0 0.0
    %197 = vmatprep.subr.mxu0 0.0
    %198 = vmatpush2.msra.mxu0 0.0
    %199 = vmatprep.subr.mxu0 0.0
    %200 = vmatpush2.msra.mxu0 0.0
    %201 = vmatprep.mubr.f32.mxu0 0.0
    %202 = vmatmul.mubr.f32.gmra.mxu0 %v112
    %v203 = vpop.f32.mrf.mxu0
    %v204 = vadd.f32 0.0, %v203
    %v205 = vpop.f32.mrf.mxu0
    %206 = vmatprep.mubr.f32.mxu0 0.0
    %207 = vmatmul.mubr.f32.gmra.mxu0 %v117
    %v208 = vpop.f32.mrf.mxu0
    %v209 = vadd.f32 0.0, %v208
    %v210 = vpop.f32.mrf.mxu0
    %211 = vdwg.mxu0
    %v212 = vmul.f32 %v112, %v112
    %v213 = vmul.f32 %v117, %v117
    %214 = vmatprep.subr.mxu0 0.0
    %215 = vmatpush1.msra.mxu0 %v135
    %216 = vmatprep.subr.mxu0 0.0
    %217 = vmatpush1.msra.mxu0 %v134
    %218 = vmatprep.subr.mxu0 0.0
    %219 = vmatpush1.msra.mxu0 %v133
    %220 = vmatprep.subr.mxu0 0.0
    %221 = vmatpush1.msra.mxu0 %v132
    %222 = vmatprep.subr.mxu0 0.0
    %223 = vmatpush1.msra.mxu0 %v131
    %224 = vmatprep.subr.mxu0 0.0
    %225 = vmatpush1.msra.mxu0 %v130
    %226 = vmatprep.subr.mxu0 0.0
    %227 = vmatpush1.msra.mxu0 %v129
    %228 = vmatprep.subr.mxu0 0.0
    %229 = vmatpush1.msra.mxu0 %v128
    %230 = vmatprep.subr.mxu0 0.0
    %231 = vmatpush1.msra.mxu0 %v127
    %232 = vmatprep.subr.mxu0 0.0
    %233 = vmatpush1.msra.mxu0 %v126
    %234 = vmatprep.subr.mxu0 0.0
    %235 = vmatpush1.msra.mxu0 %v125
    %236 = vmatprep.subr.mxu0 0.0
    %237 = vmatpush1.msra.mxu0 %v124
    %238 = vmatprep.subr.mxu0 0.0
    %239 = vmatpush1.msra.mxu0 %v123
    %240 = vmatprep.subr.mxu0 0.0
    %241 = vmatpush1.msra.mxu0 %v122
    %242 = vmatprep.subr.mxu0 0.0
    %243 = vmatpush1.msra.mxu0 %v121
    %244 = vmatprep.subr.mxu0 0.0
    %245 = vmatpush1.msra.mxu0 %v120
    %246 = vmatprep.subr.mxu0 0.0
    %247 = vmatpush2.msra.mxu0 0.0
    %248 = vmatprep.subr.mxu0 0.0
    %249 = vmatpush2.msra.mxu0 0.0
    %250 = vmatprep.subr.mxu0 0.0
    %251 = vmatpush2.msra.mxu0 0.0
    %252 = vmatprep.subr.mxu0 0.0
    %253 = vmatpush2.msra.mxu0 0.0
    %254 = vmatprep.subr.mxu0 0.0
    %255 = vmatpush2.msra.mxu0 0.0
    %256 = vmatprep.subr.mxu0 0.0
    %257 = vmatpush2.msra.mxu0 0.0
    %258 = vmatprep.subr.mxu0 0.0
    %259 = vmatpush2.msra.mxu0 0.0
    %260 = vmatprep.subr.mxu0 0.0
    %261 = vmatpush2.msra.mxu0 0.0
    %262 = vmatprep.subr.mxu0 0.0
    %263 = vmatpush2.msra.mxu0 0.0
    %264 = vmatprep.subr.mxu0 0.0
    %265 = vmatpush2.msra.mxu0 0.0
    %266 = vmatprep.subr.mxu0 0.0
    %267 = vmatpush2.msra.mxu0 0.0
    %268 = vmatprep.subr.mxu0 0.0
    %269 = vmatpush2.msra.mxu0 0.0
    %270 = vmatprep.subr.mxu0 0.0
    %271 = vmatpush2.msra.mxu0 0.0
    %272 = vmatprep.subr.mxu0 0.0
    %273 = vmatpush2.msra.mxu0 0.0
    %274 = vmatprep.subr.mxu0 0.0
    %275 = vmatpush2.msra.mxu0 0.0
    %276 = vmatprep.subr.mxu0 0.0
    %277 = vmatpush2.msra.mxu0 0.0
    %278 = vmatprep.mubr.f32.mxu0 0.0
    %279 = vmatmul.mubr.f32.gmra.mxu0 %v212
    %v280 = vpop.f32.mrf.mxu0
    %v281 = vadd.f32 0.0, %v280
    %v282 = vpop.f32.mrf.mxu0
    %283 = vmatprep.mubr.f32.mxu0 0.0
    %284 = vmatmul.mubr.f32.gmra.mxu0 %v213
    %v285 = vpop.f32.mrf.mxu0
    %v286 = vadd.f32 0.0, %v285
    %v287 = vpop.f32.mrf.mxu0
    %288 = vdwg.mxu0
    %v289 = vmul.f32 %v204, 0.125
    %v290 = vmul.f32 %v209, 0.125
    %v291 = vmul.f32 %v281, 0.125
    %v292 = vmul.f32 %v286, 0.125
    %v293 = vmul.f32 %v289, %v289
    %v294 = vmul.f32 %v290, %v290
    %v295 = vsub.f32 %v291, %v293
    %v296 = vsub.f32 %v292, %v294
    %v297 = vmax.f32 %v295, 0.0
    %v298 = vmax.f32 %v296, 0.0
    %vm299 = vcmask 31744
    %v301 = vsel %vm299, %v289, 0
    %v304 = vsel %vm299, %v290, 0
    %vm306 = vcmask 1043456
    %v308 = vsel %vm306, %v136, 0
    %310 = vmatprep.subr.mxu0 0.0
    %311 = vmatpush1.msra.mxu0 0.0
    %312 = vmatprep.subr.mxu0 0.0
    %313 = vmatpush1.msra.mxu0 0.0
    %314 = vmatprep.subr.mxu0 0.0
    %315 = vmatpush1.msra.mxu0 0.0
    %316 = vmatprep.subr.mxu0 0.0
    %317 = vmatpush1.msra.mxu0 0.0
    %318 = vmatprep.subr.mxu0 0.0
    %319 = vmatpush1.msra.mxu0 0.0
    %320 = vmatprep.subr.mxu0 0.0
    %321 = vmatpush1.msra.mxu0 0.0
    %322 = vmatprep.subr.mxu0 0.0
    %323 = vmatpush1.msra.mxu0 0.0
    %324 = vmatprep.subr.mxu0 0.0
    %325 = vmatpush1.msra.mxu0 0.0
    %326 = vmatprep.subr.mxu0 0.0
    %327 = vmatpush1.msra.mxu0 0.0
    %328 = vmatprep.subr.mxu0 0.0
    %329 = vmatpush1.msra.mxu0 0.0
    %330 = vmatprep.subr.mxu0 0.0
    %331 = vmatpush1.msra.mxu0 0.0
    %332 = vmatprep.subr.mxu0 0.0
    %333 = vmatpush1.msra.mxu0 0.0
    %334 = vmatprep.subr.mxu0 0.0
    %335 = vmatpush1.msra.mxu0 0.0
    %336 = vmatprep.subr.mxu0 0.0
    %337 = vmatpush1.msra.mxu0 0.0
    %338 = vmatprep.subr.mxu0 0.0
    %339 = vmatpush1.msra.mxu0 0.0
    %340 = vmatprep.subr.mxu0 0.0
    %341 = vmatpush1.msra.mxu0 %v308
    %342 = vmatprep.subr.mxu0 0.0
    %343 = vmatpush2.msra.mxu0 0.0
    %344 = vmatprep.subr.mxu0 0.0
    %345 = vmatpush2.msra.mxu0 0.0
    %346 = vmatprep.subr.mxu0 0.0
    %347 = vmatpush2.msra.mxu0 0.0
    %348 = vmatprep.subr.mxu0 0.0
    %349 = vmatpush2.msra.mxu0 0.0
    %350 = vmatprep.subr.mxu0 0.0
    %351 = vmatpush2.msra.mxu0 0.0
    %352 = vmatprep.subr.mxu0 0.0
    %353 = vmatpush2.msra.mxu0 0.0
    %354 = vmatprep.subr.mxu0 0.0
    %355 = vmatpush2.msra.mxu0 0.0
    %356 = vmatprep.subr.mxu0 0.0
    %357 = vmatpush2.msra.mxu0 0.0
    %358 = vmatprep.subr.mxu0 0.0
    %359 = vmatpush2.msra.mxu0 0.0
    %360 = vmatprep.subr.mxu0 0.0
    %361 = vmatpush2.msra.mxu0 0.0
    %362 = vmatprep.subr.mxu0 0.0
    %363 = vmatpush2.msra.mxu0 0.0
    %364 = vmatprep.subr.mxu0 0.0
    %365 = vmatpush2.msra.mxu0 0.0
    %366 = vmatprep.subr.mxu0 0.0
    %367 = vmatpush2.msra.mxu0 0.0
    %368 = vmatprep.subr.mxu0 0.0
    %369 = vmatpush2.msra.mxu0 0.0
    %370 = vmatprep.subr.mxu0 0.0
    %371 = vmatpush2.msra.mxu0 0.0
    %372 = vmatprep.subr.mxu0 0.0
    %373 = vmatpush2.msra.mxu0 0.0
    %374 = vmatprep.mubr.f32.mxu0 0.0
    %375 = vmatmul.mubr.f32.gmra.mxu0 %v301
    %v376 = vpop.f32.mrf.mxu0
    %v377 = vadd.f32 0.0, %v376
    %v378 = vpop.f32.mrf.mxu0
    %379 = vmatprep.mubr.f32.mxu0 0.0
    %380 = vmatmul.mubr.f32.gmra.mxu0 %v304
    %v381 = vpop.f32.mrf.mxu0
    %v382 = vadd.f32 0.0, %v381
    %v383 = vpop.f32.mrf.mxu0
    %384 = vdwg.mxu0
    %v385 = vsub.f32 %v112, %v377
    %v386 = vsub.f32 %v117, %v382
    %v388 = vsel %vm299, %v297, 0
    %v391 = vsel %vm299, %v298, 0
    %393 = vmatprep.subr.mxu0 0.0
    %394 = vmatpush1.msra.mxu0 0.0
    %395 = vmatprep.subr.mxu0 0.0
    %396 = vmatpush1.msra.mxu0 0.0
    %397 = vmatprep.subr.mxu0 0.0
    %398 = vmatpush1.msra.mxu0 0.0
    %399 = vmatprep.subr.mxu0 0.0
    %400 = vmatpush1.msra.mxu0 0.0
    %401 = vmatprep.subr.mxu0 0.0
    %402 = vmatpush1.msra.mxu0 0.0
    %403 = vmatprep.subr.mxu0 0.0
    %404 = vmatpush1.msra.mxu0 0.0
    %405 = vmatprep.subr.mxu0 0.0
    %406 = vmatpush1.msra.mxu0 0.0
    %407 = vmatprep.subr.mxu0 0.0
    %408 = vmatpush1.msra.mxu0 0.0
    %409 = vmatprep.subr.mxu0 0.0
    %410 = vmatpush1.msra.mxu0 0.0
    %411 = vmatprep.subr.mxu0 0.0
    %412 = vmatpush1.msra.mxu0 0.0
    %413 = vmatprep.subr.mxu0 0.0
    %414 = vmatpush1.msra.mxu0 0.0
    %415 = vmatprep.subr.mxu0 0.0
    %416 = vmatpush1.msra.mxu0 0.0
    %417 = vmatprep.subr.mxu0 0.0
    %418 = vmatpush1.msra.mxu0 0.0
    %419 = vmatprep.subr.mxu0 0.0
    %420 = vmatpush1.msra.mxu0 0.0
    %421 = vmatprep.subr.mxu0 0.0
    %422 = vmatpush1.msra.mxu0 0.0
    %423 = vmatprep.subr.mxu0 0.0
    %424 = vmatpush1.msra.mxu0 %v308
    %425 = vmatprep.subr.mxu0 0.0
    %426 = vmatpush2.msra.mxu0 0.0
    %427 = vmatprep.subr.mxu0 0.0
    %428 = vmatpush2.msra.mxu0 0.0
    %429 = vmatprep.subr.mxu0 0.0
    %430 = vmatpush2.msra.mxu0 0.0
    %431 = vmatprep.subr.mxu0 0.0
    %432 = vmatpush2.msra.mxu0 0.0
    %433 = vmatprep.subr.mxu0 0.0
    %434 = vmatpush2.msra.mxu0 0.0
    %435 = vmatprep.subr.mxu0 0.0
    %436 = vmatpush2.msra.mxu0 0.0
    %437 = vmatprep.subr.mxu0 0.0
    %438 = vmatpush2.msra.mxu0 0.0
    %439 = vmatprep.subr.mxu0 0.0
    %440 = vmatpush2.msra.mxu0 0.0
    %441 = vmatprep.subr.mxu0 0.0
    %442 = vmatpush2.msra.mxu0 0.0
    %443 = vmatprep.subr.mxu0 0.0
    %444 = vmatpush2.msra.mxu0 0.0
    %445 = vmatprep.subr.mxu0 0.0
    %446 = vmatpush2.msra.mxu0 0.0
    %447 = vmatprep.subr.mxu0 0.0
    %448 = vmatpush2.msra.mxu0 0.0
    %449 = vmatprep.subr.mxu0 0.0
    %450 = vmatpush2.msra.mxu0 0.0
    %451 = vmatprep.subr.mxu0 0.0
    %452 = vmatpush2.msra.mxu0 0.0
    %453 = vmatprep.subr.mxu0 0.0
    %454 = vmatpush2.msra.mxu0 0.0
    %455 = vmatprep.subr.mxu0 0.0
    %456 = vmatpush2.msra.mxu0 0.0
    %457 = vmatprep.mubr.f32.mxu0 0.0
    %458 = vmatmul.mubr.f32.gmra.mxu0 %v388
    %v459 = vpop.f32.mrf.mxu0
    %v460 = vadd.f32 1e-05, %v459
    %v461 = vpop.f32.mrf.mxu0
    %462 = vmatprep.mubr.f32.mxu0 0.0
    %463 = vmatmul.mubr.f32.gmra.mxu0 %v391
    %v464 = vpop.f32.mrf.mxu0
    %v465 = vadd.f32 1e-05, %v464
    %v466 = vpop.f32.mrf.mxu0
    %467 = vdwg.mxu0
    %v468 = vrsqrt.pop %v460
    %v469 = vrsqrt.pop %v465
    %v470 = vmul.f32 %v385, %v468
    %v471 = vmul.f32 %v386, %v469
    %v472 = vlaneseq
    %v473 = vshrl.u32 %v472, 7
    %v474 = vsub.s32 1, %v473
    %v475 = vrot.slane %v27, %v474
    %v476 = vmul.f32 %v470, %v475
    %v477 = vmul.f32 %v471, %v475
    %v478 = vlaneseq
    %v479 = vshrl.u32 %v478, 7
    %v480 = vsub.s32 2, %v479
    %v481 = vrot.slane %v27, %v480
    %v482 = vadd.f32 %v476, %v481
    %v483 = vadd.f32 %v477, %v481
    %v484 = vmax.f32 %v482, 0.0
    %v485 = vmax.f32 %v483, 0.0
    %v486 = vld [vmem:[%s3] sm:$0xff]
    %v487 = vld [vmem:[%s3 + $0x8] sm:$0xff]
    %v488 = vld [vmem:[%s3 + $0x10] sm:$0xff]
    %v489 = vld [vmem:[%s3 + $0x18] sm:$0xff]
    %v490 = vld [vmem:[%s3 + $0x20] sm:$0xff]
    %v491 = vld [vmem:[%s3 + $0x28] sm:$0xff]
    %v492 = vld [vmem:[%s3 + $0x30] sm:$0xff]
    %v493 = vld [vmem:[%s3 + $0x38] sm:$0xff]
    %v494 = vld [vmem:[%s3 + $0x40] sm:$0xff]
    %v495 = vld [vmem:[%s3 + $0x48] sm:$0xff]
    %v496 = vld [vmem:[%s3 + $0x50] sm:$0xff]
    %v497 = vld [vmem:[%s3 + $0x58] sm:$0xff]
    %v498 = vld [vmem:[%s3 + $0x60] sm:$0xff]
    %v499 = vld [vmem:[%s3 + $0x68] sm:$0xff]
    %v500 = vld [vmem:[%s3 + $0x70] sm:$0xff]
    %v501 = vld [vmem:[%s3 + $0x78] sm:$0xff]
    %v502 = vld [vmem:[%s4] sm:$0x1]
    %v504 = vlaneseq
    %v505 = vshrl.u32 %v504, 7
    %v506 = vsub.s32 0, %v505
    %v507 = vrot.slane %v502, %v506
    %509 = vmatprep.subr.mxu0 0.0
    %510 = vmatpush1.msra.mxu0 %v501
    %511 = vmatprep.subr.mxu0 0.0
    %512 = vmatpush1.msra.mxu0 %v500
    %513 = vmatprep.subr.mxu0 0.0
    %514 = vmatpush1.msra.mxu0 %v499
    %515 = vmatprep.subr.mxu0 0.0
    %516 = vmatpush1.msra.mxu0 %v498
    %517 = vmatprep.subr.mxu0 0.0
    %518 = vmatpush1.msra.mxu0 %v497
    %519 = vmatprep.subr.mxu0 0.0
    %520 = vmatpush1.msra.mxu0 %v496
    %521 = vmatprep.subr.mxu0 0.0
    %522 = vmatpush1.msra.mxu0 %v495
    %523 = vmatprep.subr.mxu0 0.0
    %524 = vmatpush1.msra.mxu0 %v494
    %525 = vmatprep.subr.mxu0 0.0
    %526 = vmatpush1.msra.mxu0 %v493
    %527 = vmatprep.subr.mxu0 0.0
    %528 = vmatpush1.msra.mxu0 %v492
    %529 = vmatprep.subr.mxu0 0.0
    %530 = vmatpush1.msra.mxu0 %v491
    %531 = vmatprep.subr.mxu0 0.0
    %532 = vmatpush1.msra.mxu0 %v490
    %533 = vmatprep.subr.mxu0 0.0
    %534 = vmatpush1.msra.mxu0 %v489
    %535 = vmatprep.subr.mxu0 0.0
    %536 = vmatpush1.msra.mxu0 %v488
    %537 = vmatprep.subr.mxu0 0.0
    %538 = vmatpush1.msra.mxu0 %v487
    %539 = vmatprep.subr.mxu0 0.0
    %540 = vmatpush1.msra.mxu0 %v486
    %541 = vmatprep.subr.mxu0 0.0
    %542 = vmatpush2.msra.mxu0 0.0
    %543 = vmatprep.subr.mxu0 0.0
    %544 = vmatpush2.msra.mxu0 0.0
    %545 = vmatprep.subr.mxu0 0.0
    %546 = vmatpush2.msra.mxu0 0.0
    %547 = vmatprep.subr.mxu0 0.0
    %548 = vmatpush2.msra.mxu0 0.0
    %549 = vmatprep.subr.mxu0 0.0
    %550 = vmatpush2.msra.mxu0 0.0
    %551 = vmatprep.subr.mxu0 0.0
    %552 = vmatpush2.msra.mxu0 0.0
    %553 = vmatprep.subr.mxu0 0.0
    %554 = vmatpush2.msra.mxu0 0.0
    %555 = vmatprep.subr.mxu0 0.0
    %556 = vmatpush2.msra.mxu0 0.0
    %557 = vmatprep.subr.mxu0 0.0
    %558 = vmatpush2.msra.mxu0 0.0
    %559 = vmatprep.subr.mxu0 0.0
    %560 = vmatpush2.msra.mxu0 0.0
    %561 = vmatprep.subr.mxu0 0.0
    %562 = vmatpush2.msra.mxu0 0.0
    %563 = vmatprep.subr.mxu0 0.0
    %564 = vmatpush2.msra.mxu0 0.0
    %565 = vmatprep.subr.mxu0 0.0
    %566 = vmatpush2.msra.mxu0 0.0
    %567 = vmatprep.subr.mxu0 0.0
    %568 = vmatpush2.msra.mxu0 0.0
    %569 = vmatprep.subr.mxu0 0.0
    %570 = vmatpush2.msra.mxu0 0.0
    %571 = vmatprep.subr.mxu0 0.0
    %572 = vmatpush2.msra.mxu0 0.0
    %573 = vmatprep.mubr.f32.mxu0 0.0
    %574 = vmatmul.mubr.f32.gmra.mxu0 %v484
    %v575 = vpop.f32.mrf.mxu0
    %v576 = vadd.f32 %v507, %v575
    %v577 = vpop.f32.mrf.mxu0
    %578 = vmatprep.mubr.f32.mxu0 0.0
    %579 = vmatmul.mubr.f32.gmra.mxu0 %v485
    %v580 = vpop.f32.mrf.mxu0
    %v581 = vadd.f32 %v507, %v580
    %v582 = vpop.f32.mrf.mxu0
    %583 = vdwg.mxu0
    %vm584 = vcmask 130048
    %585 = vst.msk [vmem:[#allocation2] sm:$0xff] %vm584, %v576
    %586 = vst.msk [vmem:[#allocation2 + $0x8] sm:$0xff] %vm584, %v581
    // Predicated region
    $region30: #{tpu_custom_call.1} parent=1 // pred_check
      _
    $region31: #{tpu_custom_call.1} parent=1 // pred_check_branch
      %588 = sbr.rel (0) target = $region33
    $region32: #{tpu_custom_call.1} parent=1 // pred_region
      %s590 = ssub.s32 256, 256
      %591 = vsyncadd [#allocation3], %s590
      %s592 = sshll.u32 [#allocation2], 4
      %s593 = int_to_ptr.vmem [resolvable:$true] %s592
      %598 = dma.vmem_to_hbm [thread:$0]  %s593, 256, %s7, [#allocation3], 128, 128, 8
    $region33: #{tpu_custom_call.1} parent=1 // pred_fallthru
      _
    // Predicated region
    $region34: #{tpu_custom_call.1} parent=1 // pred_check
      _
    $region35: #{tpu_custom_call.1} parent=1 // pred_check_branch
      %600 = sbr.rel (0) target = $region37
    $region36: #{tpu_custom_call.1} parent=1 // pred_region
      %601 = dma.done [#allocation3], 256
    $region37: #{tpu_custom_call.1} parent=1 // pred_fallthru
      _
    %602 = vsyncpa [#allocation3], 1

</llo_original>
